<compile_context>
chip_gen: v7x
topology: tpu7x:2x2x1
jax: 0.10.0
libtpu: 0.0.40
codegen_flags: <defaults>
</compile_context>

<pallas_src>
import jax
import jax.numpy as jnp
from jax.experimental import pallas as pl
from jax.experimental.pallas import tpu as pltpu

IN_FEATURES = 361 + 7   # 368
HIDDEN = 8
OUT_FEATURES = 25

# Max batch-tile rows.  2 x-buffers * 4096 * 368 * 4B ≈ 12 MiB  -> fits v7x's
# smaller VMEM while keeping per-step overhead (~0.35 us) well under 10%.
MAX_TILE_B = 4096


def _round_up(n, m):
    return ((n + m - 1) // m) * m


def _mlp_kernel(x_ref,
                w1_ref, b1_ref,
                w2_ref, b2_ref,
                w3_ref, b3_ref,
                w4_ref, b4_ref,
                o_ref):
    x = x_ref[...]

    # Layer 1: (TB, 368) @ (368, 8) + (1, 8) -> ReLU
    h = jnp.dot(x, w1_ref[...], preferred_element_type=jnp.float32) + b1_ref[...]
    h = jnp.maximum(h, 0.0)

    # Layer 2: (TB, 8) @ (8, 8) + (1, 8) -> ReLU
    h = jnp.dot(h, w2_ref[...], preferred_element_type=jnp.float32) + b2_ref[...]
    h = jnp.maximum(h, 0.0)

    # Layer 3: (TB, 8) @ (8, 8) + (1, 8) -> ReLU
    h = jnp.dot(h, w3_ref[...], preferred_element_type=jnp.float32) + b3_ref[...]
    h = jnp.maximum(h, 0.0)

    # Output layer: (TB, 8) @ (8, 25) + (1, 25)  (no activation)
    out = jnp.dot(h, w4_ref[...], preferred_element_type=jnp.float32) + b4_ref[...]
    o_ref[...] = out.astype(o_ref.dtype)


def moja_siec_forward(x, params, *, tile_b=None):
    """x: (B, 368) float32. params: dict of weights/biases. Returns (B, 25)."""
    B = x.shape[0]
    w1, b1 = params["w1"], params["b1"]
    w2, b2 = params["w2"], params["b2"]
    w3, b3 = params["w3"], params["b3"]
    w4, b4 = params["w4"], params["b4"]

    # Batch tile: multiple of 8 (f32 sublane), capped for VMEM (v7x = 64 MiB).
    if tile_b is None:
        tile_b = min(MAX_TILE_B, _round_up(B, 8))
    tile_b = _round_up(tile_b, 8)

    # Pad batch so the grid divides evenly; extra rows are sliced off below.
    b_padded = _round_up(B, tile_b)
    if b_padded != B:
        x = jnp.pad(x, ((0, b_padded - B), (0, 0)))
    n_tiles = b_padded // tile_b

    def batch_spec(cols):
        # x / out: new block per grid step along the batch axis.
        return pl.BlockSpec((tile_b, cols), lambda i: (i, 0))

    def resident_spec(shape):
        # Weights/biases: constant block index -> fetched once, VMEM-resident.
        return pl.BlockSpec(shape, lambda i: (0, 0))

    # Rough VMEM budget: double-buffered x + out tiles (lane-padded to 128),
    # plus the (lane-padded) resident weights, plus headroom.
    vmem_need = (
        2 * tile_b * IN_FEATURES * 4          # x double buffer
        + 2 * tile_b * 128 * 4                # out double buffer (lane-padded)
        + 2 * IN_FEATURES * 128 * 4           # w1 buffers (lane-padded)
        + 2 * 6 * 8 * 128 * 4                 # remaining small weights/biases
    )
    vmem_limit = int(min(max(vmem_need + (2 << 20), 16 << 20), 48 << 20))

    out = pl.pallas_call(
        _mlp_kernel,
        out_shape=jax.ShapeDtypeStruct((b_padded, OUT_FEATURES), jnp.float32),
        grid=(n_tiles,),
        in_specs=[
            batch_spec(IN_FEATURES),
            resident_spec(w1.shape), resident_spec(b1.shape),
            resident_spec(w2.shape), resident_spec(b2.shape),
            resident_spec(w3.shape), resident_spec(b3.shape),
            resident_spec(w4.shape), resident_spec(b4.shape),
        ],
        out_specs=batch_spec(OUT_FEATURES),
        compiler_params=pltpu.CompilerParams(
            dimension_semantics=("parallel",),   # shard batch tiles across TCs
            vmem_limit_bytes=vmem_limit,
        ),
    )(x, w1, b1, w2, b2, w3, b3, w4, b4)

    if b_padded != B:
        out = out[:B]
    return out


def init_params(key):
    """Deterministic init mimicking nn.Linear default (U[-1/sqrt(fan_in), 1/sqrt(fan_in)])."""
    def linear(key, fan_in, fan_out):
        kw, kb = jax.random.split(key)
        bound = 1.0 / (fan_in ** 0.5)
        w = jax.random.uniform(kw, (fan_in, fan_out), jnp.float32, -bound, bound)
        b = jax.random.uniform(kb, (1, fan_out), jnp.float32, -bound, bound)
        return w, b

    k1, k2, k3, k4 = jax.random.split(key, 4)
    w1, b1 = linear(k1, IN_FEATURES, HIDDEN)
    w2, b2 = linear(k2, HIDDEN, HIDDEN)
    w3, b3 = linear(k3, HIDDEN, HIDDEN)
    w4, b4 = linear(k4, HIDDEN, OUT_FEATURES)
    return {"w1": w1, "b1": b1, "w2": w2, "b2": b2,
            "w3": w3, "b3": b3, "w4": w4, "b4": b4}


def _reference(x, p):
    h = jnp.maximum(x @ p["w1"] + p["b1"], 0.0)
    h = jnp.maximum(h @ p["w2"] + p["b2"], 0.0)
    h = jnp.maximum(h @ p["w3"] + p["b3"], 0.0)
    return h @ p["w4"] + p["b4"]


if __name__ == "__main__":
    key = jax.random.PRNGKey(0)
    k_params, k_x = jax.random.split(key)

    B = 8  # small batch for the smoke test
    params = init_params(k_params)
    x = jax.random.normal(k_x, (B, IN_FEATURES), jnp.float32)

    out = moja_siec_forward(x, params)
    out = jax.block_until_ready(out)

    ref = _reference(x, params)
    assert out.shape == (B, OUT_FEATURES)
    assert jnp.allclose(out, ref, atol=1e-4, rtol=1e-4)

    # Also exercise a batch that is not a multiple of the tile (padding path).
    B2 = 37
    x2 = jax.random.normal(jax.random.PRNGKey(1), (B2, IN_FEATURES), jnp.float32)
    out2 = jax.block_until_ready(moja_siec_forward(x2, params))
    assert out2.shape == (B2, OUT_FEATURES)
    assert jnp.allclose(out2, _reference(x2, params), atol=1e-4, rtol=1e-4)

    print("KERNEL_OK")
</pallas_src>

<mosaic_0001>
module attributes {stable_mosaic.version = 11 : i64} {
  func.func @_mlp_kernel(%arg0: i32, %arg1: memref<8x368xf32, #tpu.memory_space<vmem>>, %arg2: memref<368x8xf32, #tpu.memory_space<vmem>>, %arg3: memref<1x8xf32, #tpu.memory_space<vmem>>, %arg4: memref<8x8xf32, #tpu.memory_space<vmem>>, %arg5: memref<1x8xf32, #tpu.memory_space<vmem>>, %arg6: memref<8x8xf32, #tpu.memory_space<vmem>>, %arg7: memref<1x8xf32, #tpu.memory_space<vmem>>, %arg8: memref<8x25xf32, #tpu.memory_space<vmem>>, %arg9: memref<1x25xf32, #tpu.memory_space<vmem>>, %arg10: memref<8x25xf32, #tpu.memory_space<vmem>>) attributes {dimension_semantics = [#tpu.dimension_semantics<parallel>], iteration_bounds = array<i64: 1>, scalar_prefetch = 0 : i64, scratch_operands = 0 : i64, tpu.core_type = #tpu.core_type<tc>, window_params = [{transform_indices = @transform_0, window_bounds = array<i64: 8, 368>}, {pipeline_mode = #tpu.pipeline_mode<synchronous>, transform_indices = @transform_1, window_bounds = array<i64: 368, 8>}, {pipeline_mode = #tpu.pipeline_mode<synchronous>, transform_indices = @transform_2, window_bounds = array<i64: 1, 8>}, {pipeline_mode = #tpu.pipeline_mode<synchronous>, transform_indices = @transform_3, window_bounds = array<i64: 8, 8>}, {pipeline_mode = #tpu.pipeline_mode<synchronous>, transform_indices = @transform_4, window_bounds = array<i64: 1, 8>}, {pipeline_mode = #tpu.pipeline_mode<synchronous>, transform_indices = @transform_5, window_bounds = array<i64: 8, 8>}, {pipeline_mode = #tpu.pipeline_mode<synchronous>, transform_indices = @transform_6, window_bounds = array<i64: 1, 8>}, {pipeline_mode = #tpu.pipeline_mode<synchronous>, transform_indices = @transform_7, window_bounds = array<i64: 8, 25>}, {pipeline_mode = #tpu.pipeline_mode<synchronous>, transform_indices = @transform_8, window_bounds = array<i64: 1, 25>}, {transform_indices = @transform_9, window_bounds = array<i64: 8, 25>}]} {
    %c0 = arith.constant 0 : index
    %c0_0 = arith.constant 0 : index
    %0 = vector.load %arg1[%c0, %c0_0] : memref<8x368xf32, #tpu.memory_space<vmem>>, vector<8x368xf32>
    %c0_1 = arith.constant 0 : index
    %c0_2 = arith.constant 0 : index
    %1 = vector.load %arg2[%c0_1, %c0_2] : memref<368x8xf32, #tpu.memory_space<vmem>>, vector<368x8xf32>
    %cst = arith.constant dense<0.000000e+00> : vector<8x8xf32>
    %2 = tpu.matmul %0, %1, %cst {dimension_numbers = #tpu.dot_dimension_numbers<[1], [0], [0], [1], [0, 0, 1, 1], [], []>} : vector<8x368xf32>, vector<368x8xf32>, vector<8x8xf32> -> vector<8x8xf32>
    %c0_3 = arith.constant 0 : index
    %c0_4 = arith.constant 0 : index
    %3 = vector.load %arg3[%c0_3, %c0_4] : memref<1x8xf32, #tpu.memory_space<vmem>>, vector<1x8xf32>
    %4 = vector.broadcast %3 : vector<1x8xf32> to vector<8x8xf32>
    %5 = arith.addf %2, %4 : vector<8x8xf32>
    %cst_5 = arith.constant 0.000000e+00 : f32
    %6 = vector.broadcast %cst_5 : f32 to vector<8x8xf32>
    %7 = arith.maximumf %5, %6 : vector<8x8xf32>
    %c0_6 = arith.constant 0 : index
    %c0_7 = arith.constant 0 : index
    %8 = vector.load %arg4[%c0_6, %c0_7] : memref<8x8xf32, #tpu.memory_space<vmem>>, vector<8x8xf32>
    %cst_8 = arith.constant dense<0.000000e+00> : vector<8x8xf32>
    %9 = tpu.matmul %7, %8, %cst_8 {dimension_numbers = #tpu.dot_dimension_numbers<[1], [0], [0], [1], [0, 0, 1, 1], [], []>} : vector<8x8xf32>, vector<8x8xf32>, vector<8x8xf32> -> vector<8x8xf32>
    %c0_9 = arith.constant 0 : index
    %c0_10 = arith.constant 0 : index
    %10 = vector.load %arg5[%c0_9, %c0_10] : memref<1x8xf32, #tpu.memory_space<vmem>>, vector<1x8xf32>
    %11 = vector.broadcast %10 : vector<1x8xf32> to vector<8x8xf32>
    %12 = arith.addf %9, %11 : vector<8x8xf32>
    %cst_11 = arith.constant 0.000000e+00 : f32
    %13 = vector.broadcast %cst_11 : f32 to vector<8x8xf32>
    %14 = arith.maximumf %12, %13 : vector<8x8xf32>
    %c0_12 = arith.constant 0 : index
    %c0_13 = arith.constant 0 : index
    %15 = vector.load %arg6[%c0_12, %c0_13] : memref<8x8xf32, #tpu.memory_space<vmem>>, vector<8x8xf32>
    %cst_14 = arith.constant dense<0.000000e+00> : vector<8x8xf32>
    %16 = tpu.matmul %14, %15, %cst_14 {dimension_numbers = #tpu.dot_dimension_numbers<[1], [0], [0], [1], [0, 0, 1, 1], [], []>} : vector<8x8xf32>, vector<8x8xf32>, vector<8x8xf32> -> vector<8x8xf32>
    %c0_15 = arith.constant 0 : index
    %c0_16 = arith.constant 0 : index
    %17 = vector.load %arg7[%c0_15, %c0_16] : memref<1x8xf32, #tpu.memory_space<vmem>>, vector<1x8xf32>
    %18 = vector.broadcast %17 : vector<1x8xf32> to vector<8x8xf32>
    %19 = arith.addf %16, %18 : vector<8x8xf32>
    %cst_17 = arith.constant 0.000000e+00 : f32
    %20 = vector.broadcast %cst_17 : f32 to vector<8x8xf32>
    %21 = arith.maximumf %19, %20 : vector<8x8xf32>
    %c0_18 = arith.constant 0 : index
    %c0_19 = arith.constant 0 : index
    %22 = vector.load %arg8[%c0_18, %c0_19] : memref<8x25xf32, #tpu.memory_space<vmem>>, vector<8x25xf32>
    %cst_20 = arith.constant dense<0.000000e+00> : vector<8x25xf32>
    %23 = tpu.matmul %21, %22, %cst_20 {dimension_numbers = #tpu.dot_dimension_numbers<[1], [0], [0], [1], [0, 0, 1, 1], [], []>} : vector<8x8xf32>, vector<8x25xf32>, vector<8x25xf32> -> vector<8x25xf32>
    %c0_21 = arith.constant 0 : index
    %c0_22 = arith.constant 0 : index
    %24 = vector.load %arg9[%c0_21, %c0_22] : memref<1x25xf32, #tpu.memory_space<vmem>>, vector<1x25xf32>
    %25 = vector.broadcast %24 : vector<1x25xf32> to vector<8x25xf32>
    %26 = arith.addf %23, %25 : vector<8x25xf32>
    %c0_23 = arith.constant 0 : index
    %c0_24 = arith.constant 0 : index
    %27 = vector.load %arg10[%c0_23, %c0_24] : memref<8x25xf32, #tpu.memory_space<vmem>>, vector<8x25xf32>
    tpu.vector_store %arg10[%c0_23, %c0_24], %26 {strides = array<i32>} : memref<8x25xf32, #tpu.memory_space<vmem>>, vector<8x25xf32>,
    return
  }
  func.func @transform_0(%arg0: i32) -> (i32, i32) {
    %c0_i32 = arith.constant 0 : i32
    %c0_i32_0 = arith.constant 0 : i32
    return %arg0, %c0_i32 : i32, i32
  }
  func.func @transform_1(%arg0: i32) -> (i32, i32) {
    %c0_i32 = arith.constant 0 : i32
    %c0_i32_0 = arith.constant 0 : i32
    %c0_i32_1 = arith.constant 0 : i32
    return %c0_i32, %c0_i32_0 : i32, i32
  }
  func.func @transform_2(%arg0: i32) -> (i32, i32) {
    %c0_i32 = arith.constant 0 : i32
    %c0_i32_0 = arith.constant 0 : i32
    %c0_i32_1 = arith.constant 0 : i32
    return %c0_i32, %c0_i32_0 : i32, i32
  }
  func.func @transform_3(%arg0: i32) -> (i32, i32) {
    %c0_i32 = arith.constant 0 : i32
    %c0_i32_0 = arith.constant 0 : i32
    %c0_i32_1 = arith.constant 0 : i32
    return %c0_i32, %c0_i32_0 : i32, i32
  }
  func.func @transform_4(%arg0: i32) -> (i32, i32) {
    %c0_i32 = arith.constant 0 : i32
    %c0_i32_0 = arith.constant 0 : i32
    %c0_i32_1 = arith.constant 0 : i32
    return %c0_i32, %c0_i32_0 : i32, i32
  }
  func.func @transform_5(%arg0: i32) -> (i32, i32) {
    %c0_i32 = arith.constant 0 : i32
    %c0_i32_0 = arith.constant 0 : i32
    %c0_i32_1 = arith.constant 0 : i32
    return %c0_i32, %c0_i32_0 : i32, i32
  }
  func.func @transform_6(%arg0: i32) -> (i32, i32) {
    %c0_i32 = arith.constant 0 : i32
    %c0_i32_0 = arith.constant 0 : i32
    %c0_i32_1 = arith.constant 0 : i32
    return %c0_i32, %c0_i32_0 : i32, i32
  }
  func.func @transform_7(%arg0: i32) -> (i32, i32) {
    %c0_i32 = arith.constant 0 : i32
    %c0_i32_0 = arith.constant 0 : i32
    %c0_i32_1 = arith.constant 0 : i32
    return %c0_i32, %c0_i32_0 : i32, i32
  }
  func.func @transform_8(%arg0: i32) -> (i32, i32) {
    %c0_i32 = arith.constant 0 : i32
    %c0_i32_0 = arith.constant 0 : i32
    %c0_i32_1 = arith.constant 0 : i32
    return %c0_i32, %c0_i32_0 : i32, i32
  }
  func.func @transform_9(%arg0: i32) -> (i32, i32) {
    %c0_i32 = arith.constant 0 : i32
    %c0_i32_0 = arith.constant 0 : i32
    return %arg0, %c0_i32 : i32, i32
  }
}

</mosaic_0001>

<llo_original>
// kernel: tpu_custom_call.1
$region0: #{tpu_custom_call.1}
  #allocation0 [shape = 'u32[]', space=smem, size = 0x4, offset = 0x4, fixed_abs, tag = 'smem constant byte address 0x4 - core index']
  #allocation1 [shape = 'u32[144,128]{1,0:T(1,128)}', space=vmem, size = 0x12000, scoped, tag = 'internal scratch']
  %s0 = inlined_call_operand.vmem [shape: f32[8,368], index: 0, kind: input, shape index: {}]
  %s1 = inlined_call_operand.vmem [shape: f32[368,8], index: 1, kind: input, shape index: {}]
  %s2 = inlined_call_operand.vmem [shape: f32[1,8], index: 2, kind: input, shape index: {}]
  %s3 = inlined_call_operand.vmem [shape: f32[8,8], index: 3, kind: input, shape index: {}]
  %s4 = inlined_call_operand.vmem [shape: f32[1,8], index: 4, kind: input, shape index: {}]
  %s5 = inlined_call_operand.vmem [shape: f32[8,8], index: 5, kind: input, shape index: {}]
  %s6 = inlined_call_operand.vmem [shape: f32[1,8], index: 6, kind: input, shape index: {}]
  %s7 = inlined_call_operand.vmem [shape: f32[8,25], index: 7, kind: input, shape index: {}]
  %s8 = inlined_call_operand.vmem [shape: f32[1,25], index: 8, kind: input, shape index: {}]
  %s9 = inlined_call_operand.hbm [shape: f32[8,25], index: 9, kind: output, shape index: {}]
  %s10 = sld [smem:[#allocation0]]
  $region46: #{tpu_custom_call.1} parent=0
    _
  %s12 = ssub.s32 1, %s10
  %s13 = scalar_select 0, %s12, %s10
  $region1: #{tpu_custom_call.1} parent=0
    #allocation2 [shape = 'u8[4096]{0}', space=vmem, size = 0x1000, scoped, tag = 'output window, operand 0, single buffered']
    #allocation3 [shape = 's32[1]{0}', space=sflag, size = 0x4, scoped, tag = 'scoped memory for tpu_custom_call.1']
    %14 = vsyncpa [#allocation3], 0
    // Predicated region
    $region2: #{tpu_custom_call.1} parent=1 // pred_check
      _
    $region3: #{tpu_custom_call.1} parent=1 // pred_check_branch
      %16 = sbr.rel (0) target = $region5
    $region4: #{tpu_custom_call.1} parent=1 // pred_region
      _
    $region5: #{tpu_custom_call.1} parent=1 // pred_fallthru
      _
    // Predicated region
    $region6: #{tpu_custom_call.1} parent=1 // pred_check
      _
    $region7: #{tpu_custom_call.1} parent=1 // pred_check_branch
      %18 = sbr.rel (0) target = $region9
    $region8: #{tpu_custom_call.1} parent=1 // pred_region
      _
    $region9: #{tpu_custom_call.1} parent=1 // pred_fallthru
      _
    // Predicated region
    $region10: #{tpu_custom_call.1} parent=1 // pred_check
      _
    $region11: #{tpu_custom_call.1} parent=1 // pred_check_branch
      %20 = sbr.rel (0) target = $region13
    $region12: #{tpu_custom_call.1} parent=1 // pred_region
      _
    $region13: #{tpu_custom_call.1} parent=1 // pred_fallthru
      _
    // Predicated region
    $region14: #{tpu_custom_call.1} parent=1 // pred_check
      _
    $region15: #{tpu_custom_call.1} parent=1 // pred_check_branch
      %22 = sbr.rel (0) target = $region17
    $region16: #{tpu_custom_call.1} parent=1 // pred_region
      _
    $region17: #{tpu_custom_call.1} parent=1 // pred_fallthru
      _
    // Predicated region
    $region18: #{tpu_custom_call.1} parent=1 // pred_check
      _
    $region19: #{tpu_custom_call.1} parent=1 // pred_check_branch
      %24 = sbr.rel (0) target = $region21
    $region20: #{tpu_custom_call.1} parent=1 // pred_region
      _
    $region21: #{tpu_custom_call.1} parent=1 // pred_fallthru
      _
    // Predicated region
    $region22: #{tpu_custom_call.1} parent=1 // pred_check
      _
    $region23: #{tpu_custom_call.1} parent=1 // pred_check_branch
      %26 = sbr.rel (0) target = $region25
    $region24: #{tpu_custom_call.1} parent=1 // pred_region
      _
    $region25: #{tpu_custom_call.1} parent=1 // pred_fallthru
      _
    // Predicated region
    $region26: #{tpu_custom_call.1} parent=1 // pred_check
      _
    $region27: #{tpu_custom_call.1} parent=1 // pred_check_branch
      %28 = sbr.rel (0) target = $region29
    $region28: #{tpu_custom_call.1} parent=1 // pred_region
      _
    $region29: #{tpu_custom_call.1} parent=1 // pred_fallthru
      _
    // Predicated region
    $region30: #{tpu_custom_call.1} parent=1 // pred_check
      _
    $region31: #{tpu_custom_call.1} parent=1 // pred_check_branch
      %30 = sbr.rel (0) target = $region33
    $region32: #{tpu_custom_call.1} parent=1 // pred_region
      _
    $region33: #{tpu_custom_call.1} parent=1 // pred_fallthru
      _
    // Predicated region
    $region34: #{tpu_custom_call.1} parent=1 // pred_check
      _
    $region35: #{tpu_custom_call.1} parent=1 // pred_check_branch
      %32 = sbr.rel (0) target = $region37
    $region36: #{tpu_custom_call.1} parent=1 // pred_region
      _
    $region37: #{tpu_custom_call.1} parent=1 // pred_fallthru
      _
    %v33 = vld [vmem:[%s0] sm:$0xff]
    %v34 = vld [vmem:[%s0 + $0x8] sm:$0xff]
    %v35 = vld [vmem:[%s0 + $0x10] sm:$0xff]
    %v36 = vld [vmem:[%s1] sm:$0xff]
    %v37 = vld [vmem:[%s1 + $0x8] sm:$0xff]
    %v38 = vld [vmem:[%s1 + $0x10] sm:$0xff]
    %v39 = vld [vmem:[%s1 + $0x18] sm:$0xff]
    %v40 = vld [vmem:[%s1 + $0x20] sm:$0xff]
    %v41 = vld [vmem:[%s1 + $0x28] sm:$0xff]
    %v42 = vld [vmem:[%s1 + $0x30] sm:$0xff]
    %v43 = vld [vmem:[%s1 + $0x38] sm:$0xff]
    %v44 = vld [vmem:[%s1 + $0x40] sm:$0xff]
    %v45 = vld [vmem:[%s1 + $0x48] sm:$0xff]
    %v46 = vld [vmem:[%s1 + $0x50] sm:$0xff]
    %v47 = vld [vmem:[%s1 + $0x58] sm:$0xff]
    %v48 = vld [vmem:[%s1 + $0x60] sm:$0xff]
    %v49 = vld [vmem:[%s1 + $0x68] sm:$0xff]
    %v50 = vld [vmem:[%s1 + $0x70] sm:$0xff]
    %v51 = vld [vmem:[%s1 + $0x78] sm:$0xff]
    %v52 = vld [vmem:[%s1 + $0x80] sm:$0xff]
    %v53 = vld [vmem:[%s1 + $0x88] sm:$0xff]
    %v54 = vld [vmem:[%s1 + $0x90] sm:$0xff]
    %v55 = vld [vmem:[%s1 + $0x98] sm:$0xff]
    %v56 = vld [vmem:[%s1 + $0xa0] sm:$0xff]
    %v57 = vld [vmem:[%s1 + $0xa8] sm:$0xff]
    %v58 = vld [vmem:[%s1 + $0xb0] sm:$0xff]
    %v59 = vld [vmem:[%s1 + $0xb8] sm:$0xff]
    %v60 = vld [vmem:[%s1 + $0xc0] sm:$0xff]
    %v61 = vld [vmem:[%s1 + $0xc8] sm:$0xff]
    %v62 = vld [vmem:[%s1 + $0xd0] sm:$0xff]
    %v63 = vld [vmem:[%s1 + $0xd8] sm:$0xff]
    %v64 = vld [vmem:[%s1 + $0xe0] sm:$0xff]
    %v65 = vld [vmem:[%s1 + $0xe8] sm:$0xff]
    %v66 = vld [vmem:[%s1 + $0xf0] sm:$0xff]
    %v67 = vld [vmem:[%s1 + $0xf8] sm:$0xff]
    %v68 = vld [vmem:[%s1 + $0x100] sm:$0xff]
    %v69 = vld [vmem:[%s1 + $0x108] sm:$0xff]
    %v70 = vld [vmem:[%s1 + $0x110] sm:$0xff]
    %v71 = vld [vmem:[%s1 + $0x118] sm:$0xff]
    %v72 = vld [vmem:[%s1 + $0x120] sm:$0xff]
    %v73 = vld [vmem:[%s1 + $0x128] sm:$0xff]
    %v74 = vld [vmem:[%s1 + $0x130] sm:$0xff]
    %v75 = vld [vmem:[%s1 + $0x138] sm:$0xff]
    %v76 = vld [vmem:[%s1 + $0x140] sm:$0xff]
    %v77 = vld [vmem:[%s1 + $0x148] sm:$0xff]
    %v78 = vld [vmem:[%s1 + $0x150] sm:$0xff]
    %v79 = vld [vmem:[%s1 + $0x158] sm:$0xff]
    %v80 = vld [vmem:[%s1 + $0x160] sm:$0xff]
    %v81 = vld [vmem:[%s1 + $0x168] sm:$0xff]
    %v82 = vld [vmem:[%s2] sm:$0x1]
    %v84 = vlaneseq
    %v85 = vshrl.u32 %v84, 7
    %v86 = vsub.s32 0, %v85
    %v87 = vrot.slane %v82, %v86
    %vm89 = vcmask 916480
    %v91 = vsel %vm89, %v35, 0
    %93 = vmatprep.subr.mxu0 0.0
    %94 = vmatpush1.msra.mxu0 %v36
    %95 = vmatprep.subr.mxu0 0.0
    %96 = vmatpush1.msra.mxu0 %v37
    %97 = vmatprep.subr.mxu0 0.0
    %98 = vmatpush1.msra.mxu0 %v38
    %99 = vmatprep.subr.mxu0 0.0
    %100 = vmatpush1.msra.mxu0 %v39
    %101 = vmatprep.subr.mxu0 0.0
    %102 = vmatpush1.msra.mxu0 %v40
    %103 = vmatprep.subr.mxu0 0.0
    %104 = vmatpush1.msra.mxu0 %v41
    %105 = vmatprep.subr.mxu0 0.0
    %106 = vmatpush1.msra.mxu0 %v42
    %107 = vmatprep.subr.mxu0 0.0
    %108 = vmatpush1.msra.mxu0 %v43
    %109 = vmatprep.subr.mxu0 0.0
    %110 = vmatpush1.msra.mxu0 %v44
    %111 = vmatprep.subr.mxu0 0.0
    %112 = vmatpush1.msra.mxu0 %v45
    %113 = vmatprep.subr.mxu0 0.0
    %114 = vmatpush1.msra.mxu0 %v46
    %115 = vmatprep.subr.mxu0 0.0
    %116 = vmatpush1.msra.mxu0 %v47
    %117 = vmatprep.subr.mxu0 0.0
    %118 = vmatpush1.msra.mxu0 %v48
    %119 = vmatprep.subr.mxu0 0.0
    %120 = vmatpush1.msra.mxu0 %v49
    %121 = vmatprep.subr.mxu0 0.0
    %122 = vmatpush1.msra.mxu0 %v50
    %123 = vmatprep.subr.mxu0 0.0
    %124 = vmatpush1.msra.mxu0 %v51
    %125 = vmatprep.subr.mxu0 0.0
    %126 = vmatpush1.msra.mxu0 %v52
    %127 = vmatprep.subr.mxu0 0.0
    %128 = vmatpush1.msra.mxu0 %v53
    %129 = vmatprep.subr.mxu0 0.0
    %130 = vmatpush1.msra.mxu0 %v54
    %131 = vmatprep.subr.mxu0 0.0
    %132 = vmatpush1.msra.mxu0 %v55
    %133 = vmatprep.subr.mxu0 0.0
    %134 = vmatpush1.msra.mxu0 %v56
    %135 = vmatprep.subr.mxu0 0.0
    %136 = vmatpush1.msra.mxu0 %v57
    %137 = vmatprep.subr.mxu0 0.0
    %138 = vmatpush1.msra.mxu0 %v58
    %139 = vmatprep.subr.mxu0 0.0
    %140 = vmatpush1.msra.mxu0 %v59
    %141 = vmatprep.subr.mxu0 0.0
    %142 = vmatpush1.msra.mxu0 %v60
    %143 = vmatprep.subr.mxu0 0.0
    %144 = vmatpush1.msra.mxu0 %v61
    %145 = vmatprep.subr.mxu0 0.0
    %146 = vmatpush1.msra.mxu0 %v62
    %147 = vmatprep.subr.mxu0 0.0
    %148 = vmatpush1.msra.mxu0 %v63
    %149 = vmatprep.subr.mxu0 0.0
    %150 = vmatpush1.msra.mxu0 %v64
    %151 = vmatprep.subr.mxu0 0.0
    %152 = vmatpush1.msra.mxu0 %v65
    %153 = vmatprep.subr.mxu0 0.0
    %154 = vmatpush1.msra.mxu0 %v66
    %155 = vmatprep.subr.mxu0 0.0
    %156 = vmatpush1.msra.mxu0 %v67
    %157 = vmatprep.mubr.f32.mxu0 %v34
    %158 = vmatmul.mubr.f32.gmra.mrb[0].mxu0 %v33
    %v159 = vpop.f32.mrb[0].mxu0
    %v160 = vadd.f32 %v87, %v159
    %v161 = vpop.f32.mrb[0].mxu0
    %162 = vdwg.mxu0
    %163 = vmatprep.subr.mxu0 0.0
    %164 = vmatpush1.msra.mxu0 %v68
    %165 = vmatprep.subr.mxu0 0.0
    %166 = vmatpush1.msra.mxu0 %v69
    %167 = vmatprep.subr.mxu0 0.0
    %168 = vmatpush1.msra.mxu0 %v70
    %169 = vmatprep.subr.mxu0 0.0
    %170 = vmatpush1.msra.mxu0 %v71
    %171 = vmatprep.subr.mxu0 0.0
    %172 = vmatpush1.msra.mxu0 %v72
    %173 = vmatprep.subr.mxu0 0.0
    %174 = vmatpush1.msra.mxu0 %v73
    %175 = vmatprep.subr.mxu0 0.0
    %176 = vmatpush1.msra.mxu0 %v74
    %177 = vmatprep.subr.mxu0 0.0
    %178 = vmatpush1.msra.mxu0 %v75
    %179 = vmatprep.subr.mxu0 0.0
    %180 = vmatpush1.msra.mxu0 %v76
    %181 = vmatprep.subr.mxu0 0.0
    %182 = vmatpush1.msra.mxu0 %v77
    %183 = vmatprep.subr.mxu0 0.0
    %184 = vmatpush1.msra.mxu0 %v78
    %185 = vmatprep.subr.mxu0 0.0
    %186 = vmatpush1.msra.mxu0 %v79
    %187 = vmatprep.subr.mxu0 0.0
    %188 = vmatpush1.msra.mxu0 %v80
    %189 = vmatprep.subr.mxu0 0.0
    %190 = vmatpush1.msra.mxu0 %v81
    %191 = vmatprep.subr.mxu0 0.0
    %192 = vmatpush1.msra.mxu0 0.0
    %193 = vmatprep.subr.mxu0 0.0
    %194 = vmatpush1.msra.mxu0 0.0
    %195 = vmatprep.subr.mxu0 0.0
    %196 = vmatpush1.msra.mxu0 0.0
    %197 = vmatprep.subr.mxu0 0.0
    %198 = vmatpush1.msra.mxu0 0.0
    %199 = vmatprep.subr.mxu0 0.0
    %200 = vmatpush1.msra.mxu0 0.0
    %201 = vmatprep.subr.mxu0 0.0
    %202 = vmatpush1.msra.mxu0 0.0
    %203 = vmatprep.subr.mxu0 0.0
    %204 = vmatpush1.msra.mxu0 0.0
    %205 = vmatprep.subr.mxu0 0.0
    %206 = vmatpush1.msra.mxu0 0.0
    %207 = vmatprep.subr.mxu0 0.0
    %208 = vmatpush1.msra.mxu0 0.0
    %209 = vmatprep.subr.mxu0 0.0
    %210 = vmatpush1.msra.mxu0 0.0
    %211 = vmatprep.subr.mxu0 0.0
    %212 = vmatpush1.msra.mxu0 0.0
    %213 = vmatprep.subr.mxu0 0.0
    %214 = vmatpush1.msra.mxu0 0.0
    %215 = vmatprep.subr.mxu0 0.0
    %216 = vmatpush1.msra.mxu0 0.0
    %217 = vmatprep.subr.mxu0 0.0
    %218 = vmatpush1.msra.mxu0 0.0
    %219 = vmatprep.subr.mxu0 0.0
    %220 = vmatpush1.msra.mxu0 0.0
    %221 = vmatprep.subr.mxu0 0.0
    %222 = vmatpush1.msra.mxu0 0.0
    %223 = vmatprep.subr.mxu0 0.0
    %224 = vmatpush1.msra.mxu0 0.0
    %225 = vmatprep.subr.mxu0 0.0
    %226 = vmatpush1.msra.mxu0 0.0
    %227 = vmatprep.mubr.f32.mxu0 0.0
    %228 = vmatmul.mubr.f32.gmra.mrb[0].mxu0 %v91
    %v229 = vpop.f32.mrb[0].mxu0
    %v230 = vadd.f32 %v160, %v229
    %v231 = vpop.f32.mrb[0].mxu0
    %232 = vdwg.mxu0
    %v233 = vmax.f32 %v230, 0.0
    %v234 = vld [vmem:[%s3] sm:$0xff]
    %v235 = vld [vmem:[%s4] sm:$0x1]
    %v237 = vlaneseq
    %v238 = vshrl.u32 %v237, 7
    %v239 = vsub.s32 0, %v238
    %v240 = vrot.slane %v235, %v239
    %vm242 = vcmask 64512
    %v244 = vsel %vm242, %v233, 0
    %246 = vmatprep.subr.mxu0 0.0
    %247 = vmatpush1.msra.mxu0 %v234
    %248 = vmatprep.subr.mxu0 0.0
    %249 = vmatpush1.msra.mxu0 0.0
    %250 = vmatprep.subr.mxu0 0.0
    %251 = vmatpush1.msra.mxu0 0.0
    %252 = vmatprep.subr.mxu0 0.0
    %253 = vmatpush1.msra.mxu0 0.0
    %254 = vmatprep.subr.mxu0 0.0
    %255 = vmatpush1.msra.mxu0 0.0
    %256 = vmatprep.subr.mxu0 0.0
    %257 = vmatpush1.msra.mxu0 0.0
    %258 = vmatprep.subr.mxu0 0.0
    %259 = vmatpush1.msra.mxu0 0.0
    %260 = vmatprep.subr.mxu0 0.0
    %261 = vmatpush1.msra.mxu0 0.0
    %262 = vmatprep.subr.mxu0 0.0
    %263 = vmatpush1.msra.mxu0 0.0
    %264 = vmatprep.subr.mxu0 0.0
    %265 = vmatpush1.msra.mxu0 0.0
    %266 = vmatprep.subr.mxu0 0.0
    %267 = vmatpush1.msra.mxu0 0.0
    %268 = vmatprep.subr.mxu0 0.0
    %269 = vmatpush1.msra.mxu0 0.0
    %270 = vmatprep.subr.mxu0 0.0
    %271 = vmatpush1.msra.mxu0 0.0
    %272 = vmatprep.subr.mxu0 0.0
    %273 = vmatpush1.msra.mxu0 0.0
    %274 = vmatprep.subr.mxu0 0.0
    %275 = vmatpush1.msra.mxu0 0.0
    %276 = vmatprep.subr.mxu0 0.0
    %277 = vmatpush1.msra.mxu0 0.0
    %278 = vmatprep.subr.mxu0 0.0
    %279 = vmatpush1.msra.mxu0 0.0
    %280 = vmatprep.subr.mxu0 0.0
    %281 = vmatpush1.msra.mxu0 0.0
    %282 = vmatprep.subr.mxu0 0.0
    %283 = vmatpush1.msra.mxu0 0.0
    %284 = vmatprep.subr.mxu0 0.0
    %285 = vmatpush1.msra.mxu0 0.0
    %286 = vmatprep.subr.mxu0 0.0
    %287 = vmatpush1.msra.mxu0 0.0
    %288 = vmatprep.subr.mxu0 0.0
    %289 = vmatpush1.msra.mxu0 0.0
    %290 = vmatprep.subr.mxu0 0.0
    %291 = vmatpush1.msra.mxu0 0.0
    %292 = vmatprep.subr.mxu0 0.0
    %293 = vmatpush1.msra.mxu0 0.0
    %294 = vmatprep.subr.mxu0 0.0
    %295 = vmatpush1.msra.mxu0 0.0
    %296 = vmatprep.subr.mxu0 0.0
    %297 = vmatpush1.msra.mxu0 0.0
    %298 = vmatprep.subr.mxu0 0.0
    %299 = vmatpush1.msra.mxu0 0.0
    %300 = vmatprep.subr.mxu0 0.0
    %301 = vmatpush1.msra.mxu0 0.0
    %302 = vmatprep.subr.mxu0 0.0
    %303 = vmatpush1.msra.mxu0 0.0
    %304 = vmatprep.subr.mxu0 0.0
    %305 = vmatpush1.msra.mxu0 0.0
    %306 = vmatprep.subr.mxu0 0.0
    %307 = vmatpush1.msra.mxu0 0.0
    %308 = vmatprep.subr.mxu0 0.0
    %309 = vmatpush1.msra.mxu0 0.0
    %310 = vmatprep.mubr.f32.mxu0 0.0
    %311 = vmatmul.mubr.f32.gmra.mrb[0].mxu0 %v244
    %v312 = vpop.f32.mrb[0].mxu0
    %v313 = vadd.f32 %v240, %v312
    %v314 = vpop.f32.mrb[0].mxu0
    %315 = vdwg.mxu0
    %v316 = vmax.f32 %v313, 0.0
    %v317 = vld [vmem:[%s5] sm:$0xff]
    %v318 = vld [vmem:[%s6] sm:$0x1]
    %v320 = vlaneseq
    %v321 = vshrl.u32 %v320, 7
    %v322 = vsub.s32 0, %v321
    %v323 = vrot.slane %v318, %v322
    %v326 = vsel %vm242, %v316, 0
    %328 = vmatprep.subr.mxu0 0.0
    %329 = vmatpush1.msra.mxu0 %v317
    %330 = vmatprep.subr.mxu0 0.0
    %331 = vmatpush1.msra.mxu0 0.0
    %332 = vmatprep.subr.mxu0 0.0
    %333 = vmatpush1.msra.mxu0 0.0
    %334 = vmatprep.subr.mxu0 0.0
    %335 = vmatpush1.msra.mxu0 0.0
    %336 = vmatprep.subr.mxu0 0.0
    %337 = vmatpush1.msra.mxu0 0.0
    %338 = vmatprep.subr.mxu0 0.0
    %339 = vmatpush1.msra.mxu0 0.0
    %340 = vmatprep.subr.mxu0 0.0
    %341 = vmatpush1.msra.mxu0 0.0
    %342 = vmatprep.subr.mxu0 0.0
    %343 = vmatpush1.msra.mxu0 0.0
    %344 = vmatprep.subr.mxu0 0.0
    %345 = vmatpush1.msra.mxu0 0.0
    %346 = vmatprep.subr.mxu0 0.0
    %347 = vmatpush1.msra.mxu0 0.0
    %348 = vmatprep.subr.mxu0 0.0
    %349 = vmatpush1.msra.mxu0 0.0
    %350 = vmatprep.subr.mxu0 0.0
    %351 = vmatpush1.msra.mxu0 0.0
    %352 = vmatprep.subr.mxu0 0.0
    %353 = vmatpush1.msra.mxu0 0.0
    %354 = vmatprep.subr.mxu0 0.0
    %355 = vmatpush1.msra.mxu0 0.0
    %356 = vmatprep.subr.mxu0 0.0
    %357 = vmatpush1.msra.mxu0 0.0
    %358 = vmatprep.subr.mxu0 0.0
    %359 = vmatpush1.msra.mxu0 0.0
    %360 = vmatprep.subr.mxu0 0.0
    %361 = vmatpush1.msra.mxu0 0.0
    %362 = vmatprep.subr.mxu0 0.0
    %363 = vmatpush1.msra.mxu0 0.0
    %364 = vmatprep.subr.mxu0 0.0
    %365 = vmatpush1.msra.mxu0 0.0
    %366 = vmatprep.subr.mxu0 0.0
    %367 = vmatpush1.msra.mxu0 0.0
    %368 = vmatprep.subr.mxu0 0.0
    %369 = vmatpush1.msra.mxu0 0.0
    %370 = vmatprep.subr.mxu0 0.0
    %371 = vmatpush1.msra.mxu0 0.0
    %372 = vmatprep.subr.mxu0 0.0
    %373 = vmatpush1.msra.mxu0 0.0
    %374 = vmatprep.subr.mxu0 0.0
    %375 = vmatpush1.msra.mxu0 0.0
    %376 = vmatprep.subr.mxu0 0.0
    %377 = vmatpush1.msra.mxu0 0.0
    %378 = vmatprep.subr.mxu0 0.0
    %379 = vmatpush1.msra.mxu0 0.0
    %380 = vmatprep.subr.mxu0 0.0
    %381 = vmatpush1.msra.mxu0 0.0
    %382 = vmatprep.subr.mxu0 0.0
    %383 = vmatpush1.msra.mxu0 0.0
    %384 = vmatprep.subr.mxu0 0.0
    %385 = vmatpush1.msra.mxu0 0.0
    %386 = vmatprep.subr.mxu0 0.0
    %387 = vmatpush1.msra.mxu0 0.0
    %388 = vmatprep.subr.mxu0 0.0
    %389 = vmatpush1.msra.mxu0 0.0
    %390 = vmatprep.subr.mxu0 0.0
    %391 = vmatpush1.msra.mxu0 0.0
    %392 = vmatprep.mubr.f32.mxu0 0.0
    %393 = vmatmul.mubr.f32.gmra.mrb[0].mxu0 %v326
    %v394 = vpop.f32.mrb[0].mxu0
    %v395 = vadd.f32 %v323, %v394
    %v396 = vpop.f32.mrb[0].mxu0
    %397 = vdwg.mxu0
    %v398 = vmax.f32 %v395, 0.0
    %v399 = vld [vmem:[%s7] sm:$0xff]
    %v400 = vld [vmem:[%s8] sm:$0x1]
    %v402 = vlaneseq
    %v403 = vshrl.u32 %v402, 7
    %v404 = vsub.s32 0, %v403
    %v405 = vrot.slane %v400, %v404
    %v408 = vsel %vm242, %v398, 0
    %410 = vmatprep.subr.mxu0 0.0
    %411 = vmatpush1.msra.mxu0 %v399
    %412 = vmatprep.subr.mxu0 0.0
    %413 = vmatpush1.msra.mxu0 0.0
    %414 = vmatprep.subr.mxu0 0.0
    %415 = vmatpush1.msra.mxu0 0.0
    %416 = vmatprep.subr.mxu0 0.0
    %417 = vmatpush1.msra.mxu0 0.0
    %418 = vmatprep.subr.mxu0 0.0
    %419 = vmatpush1.msra.mxu0 0.0
    %420 = vmatprep.subr.mxu0 0.0
    %421 = vmatpush1.msra.mxu0 0.0
    %422 = vmatprep.subr.mxu0 0.0
    %423 = vmatpush1.msra.mxu0 0.0
    %424 = vmatprep.subr.mxu0 0.0
    %425 = vmatpush1.msra.mxu0 0.0
    %426 = vmatprep.subr.mxu0 0.0
    %427 = vmatpush1.msra.mxu0 0.0
    %428 = vmatprep.subr.mxu0 0.0
    %429 = vmatpush1.msra.mxu0 0.0
    %430 = vmatprep.subr.mxu0 0.0
    %431 = vmatpush1.msra.mxu0 0.0
    %432 = vmatprep.subr.mxu0 0.0
    %433 = vmatpush1.msra.mxu0 0.0
    %434 = vmatprep.subr.mxu0 0.0
    %435 = vmatpush1.msra.mxu0 0.0
    %436 = vmatprep.subr.mxu0 0.0
    %437 = vmatpush1.msra.mxu0 0.0
    %438 = vmatprep.subr.mxu0 0.0
    %439 = vmatpush1.msra.mxu0 0.0
    %440 = vmatprep.subr.mxu0 0.0
    %441 = vmatpush1.msra.mxu0 0.0
    %442 = vmatprep.subr.mxu0 0.0
    %443 = vmatpush1.msra.mxu0 0.0
    %444 = vmatprep.subr.mxu0 0.0
    %445 = vmatpush1.msra.mxu0 0.0
    %446 = vmatprep.subr.mxu0 0.0
    %447 = vmatpush1.msra.mxu0 0.0
    %448 = vmatprep.subr.mxu0 0.0
    %449 = vmatpush1.msra.mxu0 0.0
    %450 = vmatprep.subr.mxu0 0.0
    %451 = vmatpush1.msra.mxu0 0.0
    %452 = vmatprep.subr.mxu0 0.0
    %453 = vmatpush1.msra.mxu0 0.0
    %454 = vmatprep.subr.mxu0 0.0
    %455 = vmatpush1.msra.mxu0 0.0
    %456 = vmatprep.subr.mxu0 0.0
    %457 = vmatpush1.msra.mxu0 0.0
    %458 = vmatprep.subr.mxu0 0.0
    %459 = vmatpush1.msra.mxu0 0.0
    %460 = vmatprep.subr.mxu0 0.0
    %461 = vmatpush1.msra.mxu0 0.0
    %462 = vmatprep.subr.mxu0 0.0
    %463 = vmatpush1.msra.mxu0 0.0
    %464 = vmatprep.subr.mxu0 0.0
    %465 = vmatpush1.msra.mxu0 0.0
    %466 = vmatprep.subr.mxu0 0.0
    %467 = vmatpush1.msra.mxu0 0.0
    %468 = vmatprep.subr.mxu0 0.0
    %469 = vmatpush1.msra.mxu0 0.0
    %470 = vmatprep.subr.mxu0 0.0
    %471 = vmatpush1.msra.mxu0 0.0
    %472 = vmatprep.subr.mxu0 0.0
    %473 = vmatpush1.msra.mxu0 0.0
    %474 = vmatprep.mubr.f32.mxu0 0.0
    %475 = vmatmul.mubr.f32.gmra.mrb[0].mxu0 %v408
    %v476 = vpop.f32.mrb[0].mxu0
    %v477 = vadd.f32 %v405, %v476
    %v478 = vpop.f32.mrb[0].mxu0
    %479 = vdwg.mxu0
    %vm480 = vcmask 203776
    %481 = vst.msk [vmem:[#allocation2] sm:$0xff] %vm480, %v477
    // Predicated region
    $region38: #{tpu_custom_call.1} parent=1 // pred_check
      _
    $region39: #{tpu_custom_call.1} parent=1 // pred_check_branch
      %483 = sbr.rel (0) target = $region41
    $region40: #{tpu_custom_call.1} parent=1 // pred_region
      %s485 = ssub.s32 128, 128
      %486 = vsyncadd [#allocation3], %s485
      %s488 = sshll.u32 [#allocation2], 4
      %s489 = int_to_ptr.vmem [resolvable:$true] %s488
      %491 = dma.vmem_to_hbm [thread:$0]  %s489, 128, %s9, [#allocation3]
    $region41: #{tpu_custom_call.1} parent=1 // pred_fallthru
      _
    // Predicated region
    $region42: #{tpu_custom_call.1} parent=1 // pred_check
      _
    $region43: #{tpu_custom_call.1} parent=1 // pred_check_branch
      %493 = sbr.rel (0) target = $region45
    $region44: #{tpu_custom_call.1} parent=1 // pred_region
      %494 = dma.done [#allocation3], 128
    $region45: #{tpu_custom_call.1} parent=1 // pred_fallthru
      _
    %495 = vsyncpa [#allocation3], 1

</llo_original>
